<compile_context>
chip_gen: v6e
topology: v6e:2x2x1
jax: 0.10.0
libtpu: 0.0.40
codegen_flags: <defaults>
</compile_context>

<pallas_src>
import jax
import jax.numpy as jnp
from jax import lax
from jax.experimental import pallas as pl
from jax.experimental.pallas import tpu as pltpu

# approx=True moves the reciprocal onto the otherwise-idle EUP slot; keep the
# exact form by default so results stay within tight f32 tolerance.
_APPROX_RECIPROCAL = False


def _similarity_tile(q, c, w_q, w_c, w_qc):
    """S[t, j] = c[t]·(q[j]*w_qc + w_c) + q[j]·w_q   for one context tile."""
    q_mod = q * w_qc + w_c                                        # (J, D)
    sq = lax.dot_general(w_q, q, (((1,), (1,)), ((), ())),
                         preferred_element_type=jnp.float32)      # (1, J)
    cross = lax.dot_general(c, q_mod, (((1,), (1,)), ((), ())),
                            preferred_element_type=jnp.float32)   # (blk, J)
    return cross + sq                                             # (blk, J)


def _q2c_stats_kernel(q_ref, c_ref, w_ref, q2c_ref, m_sc, l_sc, acc_sc):
    """Sweep over Tc tiles: online softmax(max_j S) weighted sum of context."""
    t = pl.program_id(1)

    @pl.when(t == 0)
    def _():
        m_sc[...] = jnp.full_like(m_sc, -jnp.inf)
        l_sc[...] = jnp.zeros_like(l_sc)
        acc_sc[...] = jnp.zeros_like(acc_sc)

    q = q_ref[0].astype(jnp.float32)             # (J, D)
    c = c_ref[0].astype(jnp.float32)             # (blk, D)
    w_q = w_ref[0:1, :].astype(jnp.float32)      # (1, D)
    w_c = w_ref[1:2, :].astype(jnp.float32)      # (1, D)
    w_qc = w_ref[2:3, :].astype(jnp.float32)     # (1, D)

    S = _similarity_tile(q, c, w_q, w_c, w_qc)               # (blk, J)
    smax = jnp.max(S, axis=-1, keepdims=True)                # (blk, 1)

    m_prev = m_sc[...]                                       # (1, 1)
    m_new = jnp.maximum(m_prev, jnp.max(smax, axis=0, keepdims=True))
    scale = jnp.exp(m_prev - m_new)                          # (1, 1)
    p = jnp.exp(smax - m_new)                                # (blk, 1)
    l_sc[...] = scale * l_sc[...] + jnp.sum(p, axis=0, keepdims=True)
    # p^T @ c on the MXU -> (1, D) running weighted sum of context rows.
    acc_sc[...] = scale * acc_sc[...] + lax.dot_general(
        p, c, (((0,), (0,)), ((), ())), preferred_element_type=jnp.float32)
    m_sc[...] = m_new

    @pl.when(t == pl.num_programs(1) - 1)
    def _():
        inv_l = pl.reciprocal(l_sc[...], approx=_APPROX_RECIPROCAL)
        q2c_ref[0] = (acc_sc[...] * inv_l).astype(q2c_ref.dtype)


def _biattn_out_kernel(q_ref, c_ref, w_ref, q2c_ref, o_ref):
    """Per (batch, Tc-tile): alpha softmax, c2q, and all three output thirds."""
    q = q_ref[0].astype(jnp.float32)             # (J, D)
    c = c_ref[0].astype(jnp.float32)             # (blk, D)
    w_q = w_ref[0:1, :].astype(jnp.float32)
    w_c = w_ref[1:2, :].astype(jnp.float32)
    w_qc = w_ref[2:3, :].astype(jnp.float32)

    S = _similarity_tile(q, c, w_q, w_c, w_qc)               # (blk, J)

    # alpha = softmax(S, axis=-1) over J, divide replaced by recip * mul.
    m = jnp.max(S, axis=-1, keepdims=True)
    e = jnp.exp(S - m)
    inv_l = pl.reciprocal(jnp.sum(e, axis=-1, keepdims=True),
                          approx=_APPROX_RECIPROCAL)
    alpha = e * inv_l                                        # (blk, J)

    c2q = jnp.dot(alpha, q, preferred_element_type=jnp.float32)  # (blk, D)
    q2c = q2c_ref[0].astype(jnp.float32)                         # (1, D)

    d = c.shape[-1]
    out_dtype = o_ref.dtype
    # Write the three thirds directly (no concatenate materialization).
    o_ref[0, :, 0:d] = c_ref[0].astype(out_dtype)            # context verbatim
    o_ref[0, :, d:2 * d] = (c * c2q).astype(out_dtype)       # context * c2q
    o_ref[0, :, 2 * d:3 * d] = (c * q2c).astype(out_dtype)   # context * q2c


def _pick_block_tc(tc, target):
    """Largest Tc tile <= target that divides Tc (multiple of 8 when tiled)."""
    if tc <= target:
        return tc
    for cand in (1024, 512, 256, 128, 64, 32, 16, 8):
        if cand <= target and tc % cand == 0:
            return cand
    return tc  # fall back to a single full block (still correct)


def _vmem_limit(block_bytes, scratch_bytes=0):
    est = 2 * block_bytes + scratch_bytes       # double-buffered blocks
    return int(min(48 * 1024 * 1024, max(16 * 1024 * 1024, 4 * est)))


def biattention_pallas(question, context, w, *, block_tc=512):
    """question: (B, J, D), context: (B, Tc, D), w: (3*D,) = [w_q|w_c|w_qc]."""
    B, J, D = question.shape
    Bc, Tc, Dc = context.shape
    assert Bc == B and Dc == D
    w3 = w.reshape(3, D)
    itm = jnp.dtype(question.dtype).itemsize

    blk = _pick_block_tc(Tc, block_tc)
    num_t = Tc // blk

    # --- pass 1: q2c = softmax_over_Tc(max_j S) @ context  -> (B, 1, D) ------
    stats_block_bytes = (J * D + blk * D + 3 * D) * itm + D * 4
    q2c = pl.pallas_call(
        _q2c_stats_kernel,
        out_shape=jax.ShapeDtypeStruct((B, 1, D), jnp.float32),
        grid_spec=pltpu.PrefetchScalarGridSpec(
            num_scalar_prefetch=0,
            grid=(B, num_t),
            in_specs=[
                pl.BlockSpec((1, J, D), lambda b, t: (b, 0, 0)),     # resident
                pl.BlockSpec((1, blk, D), lambda b, t: (b, t, 0)),   # streams
                pl.BlockSpec((3, D), lambda b, t: (0, 0)),
            ],
            out_specs=pl.BlockSpec((1, 1, D), lambda b, t: (b, 0, 0)),
            scratch_shapes=[
                pltpu.VMEM((1, 1), jnp.float32),   # running max
                pltpu.VMEM((1, 1), jnp.float32),   # running sum
                pltpu.VMEM((1, D), jnp.float32),   # running weighted sum
            ],
        ),
        compiler_params=pltpu.CompilerParams(
            dimension_semantics=("parallel", "arbitrary"),
            vmem_limit_bytes=_vmem_limit(stats_block_bytes, (2 + D) * 4),
        ),
    )(question, context, w3)

    # --- pass 2: alpha softmax, c2q, and the full (B, Tc, 3D) output ---------
    main_block_bytes = (J * D + blk * D + 3 * D + blk * 3 * D) * itm + D * 4
    out = pl.pallas_call(
        _biattn_out_kernel,
        out_shape=jax.ShapeDtypeStruct((B, Tc, 3 * D), question.dtype),
        grid_spec=pltpu.PrefetchScalarGridSpec(
            num_scalar_prefetch=0,
            grid=(B, num_t),
            in_specs=[
                pl.BlockSpec((1, J, D), lambda b, t: (b, 0, 0)),     # resident
                pl.BlockSpec((1, blk, D), lambda b, t: (b, t, 0)),   # streams
                pl.BlockSpec((3, D), lambda b, t: (0, 0)),
                pl.BlockSpec((1, 1, D), lambda b, t: (b, 0, 0)),     # q2c
            ],
            out_specs=pl.BlockSpec((1, blk, 3 * D), lambda b, t: (b, t, 0)),
        ),
        compiler_params=pltpu.CompilerParams(
            dimension_semantics=("parallel", "parallel"),
            vmem_limit_bytes=_vmem_limit(main_block_bytes),
        ),
    )(question, context, w3, q2c)
    return out


def biattention_ref(question, context, w):
    """Pure-JAX reference mirroring the PyTorch forward exactly."""
    B, J, D = question.shape
    Tc = context.shape[1]
    qt = jnp.broadcast_to(question[:, None, :, :], (B, Tc, J, D))
    ct = jnp.broadcast_to(context[:, :, None, :], (B, Tc, J, D))
    cat = jnp.concatenate([qt, ct, qt * ct], axis=-1)        # (B, Tc, J, 3D)
    S = jnp.einsum('btjk,k->btj', cat, w)                    # (B, Tc, J)
    alpha = jax.nn.softmax(S, axis=-1)
    c2q = jnp.einsum('btj,bjd->btd', alpha, question)        # (B, Tc, D)
    beta = jax.nn.softmax(jnp.max(S, axis=-1), axis=-1)      # (B, Tc)
    q2c = jnp.einsum('bt,btd->bd', beta, context)[:, None, :]
    q2c = jnp.broadcast_to(q2c, (B, Tc, D))
    return jnp.concatenate([context, context * c2q, context * q2c], axis=-1)


if __name__ == "__main__":
    B = 2
    hidden_dim = 16
    D = 2 * hidden_dim     # question/context feature dim
    J = 8                  # question_len
    Tc = 16                # context_len

    key = jax.random.PRNGKey(0)
    kq, kc, kw = jax.random.split(key, 3)
    question = jax.random.normal(kq, (B, J, D), dtype=jnp.float32)
    context = jax.random.normal(kc, (B, Tc, D), dtype=jnp.float32)
    # nn.Linear(6*hidden_dim, 1, bias=False) weight, uniform(+-1/sqrt(fan_in))
    bound = 1.0 / jnp.sqrt(jnp.float32(6 * hidden_dim))
    w = jax.random.uniform(kw, (6 * hidden_dim,), dtype=jnp.float32,
                           minval=-bound, maxval=bound)

    ref = biattention_ref(question, context, w)

    # Single-tile-per-batch path (Tc fits one block).
    out = biattention_pallas(question, context, w)
    out = jax.block_until_ready(out)
    assert out.shape == (B, Tc, 3 * D), out.shape
    assert jnp.allclose(out, ref, atol=1e-4, rtol=1e-4), \
        float(jnp.max(jnp.abs(out - ref)))

    # Multi-tile path: exercises the online beta/q2c accumulation across tiles.
    out_tiled = biattention_pallas(question, context, w, block_tc=8)
    out_tiled = jax.block_until_ready(out_tiled)
    assert jnp.allclose(out_tiled, ref, atol=1e-4, rtol=1e-4), \
        float(jnp.max(jnp.abs(out_tiled - ref)))

    print("KERNEL_OK")
</pallas_src>

<mosaic_0001>
module attributes {stable_mosaic.version = 11 : i64} {
  func.func @_q2c_stats_kernel(%arg0: i32, %arg1: i32, %arg2: memref<1x8x32xf32, #tpu.memory_space<vmem>>, %arg3: memref<1x16x32xf32, #tpu.memory_space<vmem>>, %arg4: memref<3x32xf32, #tpu.memory_space<vmem>>, %arg5: memref<1x1x32xf32, #tpu.memory_space<vmem>>, %arg6: memref<1x1xf32, #tpu.memory_space<vmem>>, %arg7: memref<1x1xf32, #tpu.memory_space<vmem>>, %arg8: memref<1x32xf32, #tpu.memory_space<vmem>>) attributes {dimension_semantics = [#tpu.dimension_semantics<parallel>, #tpu.dimension_semantics<arbitrary>], iteration_bounds = array<i64: 2, 1>, scalar_prefetch = 0 : i64, scratch_operands = 3 : i64, tpu.core_type = #tpu.core_type<tc>, window_params = [{transform_indices = @transform_0, window_bounds = array<i64: 1, 8, 32>}, {transform_indices = @transform_1, window_bounds = array<i64: 1, 16, 32>}, {pipeline_mode = #tpu.pipeline_mode<synchronous>, transform_indices = @transform_2, window_bounds = array<i64: 3, 32>}, {transform_indices = @transform_3, window_bounds = array<i64: 1, 1, 32>}]} {
    %c0_i32 = arith.constant 0 : i32
    %0 = arith.cmpi eq, %arg1, %c0_i32 : i32
    %1 = arith.extui %0 : i1 to i32
    %c0_i32_0 = arith.constant 0 : i32
    %2 = arith.cmpi ne, %1, %c0_i32_0 : i32
    scf.if %2 {
      %cst_29 = arith.constant 0xFF800000 : f32
      %45 = vector.broadcast %cst_29 : f32 to vector<1x1xf32>
      %c0_30 = arith.constant 0 : index
      %c0_31 = arith.constant 0 : index
      %46 = vector.load %arg6[%c0_30, %c0_31] : memref<1x1xf32, #tpu.memory_space<vmem>>, vector<1x1xf32>
      tpu.vector_store %arg6[%c0_30, %c0_31], %45 {strides = array<i32>} : memref<1x1xf32, #tpu.memory_space<vmem>>, vector<1x1xf32>,
      %cst_32 = arith.constant 0.000000e+00 : f32
      %47 = vector.broadcast %cst_32 : f32 to vector<1x1xf32>
      %c0_33 = arith.constant 0 : index
      %c0_34 = arith.constant 0 : index
      %48 = vector.load %arg7[%c0_33, %c0_34] : memref<1x1xf32, #tpu.memory_space<vmem>>, vector<1x1xf32>
      tpu.vector_store %arg7[%c0_33, %c0_34], %47 {strides = array<i32>} : memref<1x1xf32, #tpu.memory_space<vmem>>, vector<1x1xf32>,
      %cst_35 = arith.constant 0.000000e+00 : f32
      %49 = vector.broadcast %cst_35 : f32 to vector<1x32xf32>
      %c0_36 = arith.constant 0 : index
      %c0_37 = arith.constant 0 : index
      %50 = vector.load %arg8[%c0_36, %c0_37] : memref<1x32xf32, #tpu.memory_space<vmem>>, vector<1x32xf32>
      tpu.vector_store %arg8[%c0_36, %c0_37], %49 {strides = array<i32>} : memref<1x32xf32, #tpu.memory_space<vmem>>, vector<1x32xf32>,
    } else {
    }
    %c0 = arith.constant 0 : index
    %c0_1 = arith.constant 0 : index
    %c0_2 = arith.constant 0 : index
    %3 = vector.load %arg2[%c0, %c0_1, %c0_2] : memref<1x8x32xf32, #tpu.memory_space<vmem>>, vector<1x8x32xf32>
    %4 = vector.shape_cast %3 : vector<1x8x32xf32> to vector<8x32xf32>
    %c0_3 = arith.constant 0 : index
    %c0_4 = arith.constant 0 : index
    %c0_5 = arith.constant 0 : index
    %5 = vector.load %arg3[%c0_3, %c0_4, %c0_5] : memref<1x16x32xf32, #tpu.memory_space<vmem>>, vector<1x16x32xf32>
    %6 = vector.shape_cast %5 : vector<1x16x32xf32> to vector<16x32xf32>
    %c0_6 = arith.constant 0 : index
    %c0_7 = arith.constant 0 : index
    %7 = vector.load %arg4[%c0_6, %c0_7] : memref<3x32xf32, #tpu.memory_space<vmem>>, vector<1x32xf32>
    %c1 = arith.constant 1 : index
    %c0_8 = arith.constant 0 : index
    %8 = vector.load %arg4[%c1, %c0_8] : memref<3x32xf32, #tpu.memory_space<vmem>>, vector<1x32xf32>
    %c2 = arith.constant 2 : index
    %c0_9 = arith.constant 0 : index
    %9 = vector.load %arg4[%c2, %c0_9] : memref<3x32xf32, #tpu.memory_space<vmem>>, vector<1x32xf32>
    %10 = vector.broadcast %9 : vector<1x32xf32> to vector<8x32xf32>
    %11 = arith.mulf %4, %10 : vector<8x32xf32>
    %12 = vector.broadcast %8 : vector<1x32xf32> to vector<8x32xf32>
    %13 = arith.addf %11, %12 : vector<8x32xf32>
    %cst = arith.constant dense<0.000000e+00> : vector<1x8xf32>
    %14 = tpu.matmul %7, %4, %cst {dimension_numbers = #tpu.dot_dimension_numbers<[1], [1], [0], [0], [0, 0, 1, 0], [], []>} : vector<1x32xf32>, vector<8x32xf32>, vector<1x8xf32> -> vector<1x8xf32>
    %cst_10 = arith.constant dense<0.000000e+00> : vector<16x8xf32>
    %15 = tpu.matmul %6, %13, %cst_10 {dimension_numbers = #tpu.dot_dimension_numbers<[1], [1], [0], [0], [0, 0, 1, 0], [], []>} : vector<16x32xf32>, vector<8x32xf32>, vector<16x8xf32> -> vector<16x8xf32>
    %16 = vector.broadcast %14 : vector<1x8xf32> to vector<16x8xf32>
    %17 = arith.addf %15, %16 : vector<16x8xf32>
    %cst_11 = arith.constant dense<0xFF800000> : vector<16xf32>
    %18 = vector.multi_reduction <maximumf>, %17, %cst_11 [1] : vector<16x8xf32> to vector<16xf32>
    %19 = vector.shape_cast %18 : vector<16xf32> to vector<16x1xf32>
    %c0_12 = arith.constant 0 : index
    %c0_13 = arith.constant 0 : index
    %20 = vector.load %arg6[%c0_12, %c0_13] : memref<1x1xf32, #tpu.memory_space<vmem>>, vector<1x1xf32>
    %cst_14 = arith.constant dense<0xFF800000> : vector<1xf32>
    %21 = vector.multi_reduction <maximumf>, %19, %cst_14 [0] : vector<16x1xf32> to vector<1xf32>
    %22 = vector.shape_cast %21 : vector<1xf32> to vector<1x1xf32>
    %23 = arith.maximumf %20, %22 : vector<1x1xf32>
    %24 = arith.subf %20, %23 : vector<1x1xf32>
    %25 = math.exp %24 : vector<1x1xf32>
    %26 = vector.broadcast %23 : vector<1x1xf32> to vector<16x1xf32>
    %27 = arith.subf %19, %26 : vector<16x1xf32>
    %28 = math.exp %27 : vector<16x1xf32>
    %c0_15 = arith.constant 0 : index
    %c0_16 = arith.constant 0 : index
    %29 = vector.load %arg7[%c0_15, %c0_16] : memref<1x1xf32, #tpu.memory_space<vmem>>, vector<1x1xf32>
    %30 = arith.mulf %25, %29 : vector<1x1xf32>
    %cst_17 = arith.constant dense<0.000000e+00> : vector<1xf32>
    %31 = vector.multi_reduction <add>, %28, %cst_17 [0] : vector<16x1xf32> to vector<1xf32>
    %32 = vector.shape_cast %31 : vector<1xf32> to vector<1x1xf32>
    %33 = arith.addf %30, %32 : vector<1x1xf32>
    %c0_18 = arith.constant 0 : index
    %c0_19 = arith.constant 0 : index
    %34 = vector.load %arg7[%c0_18, %c0_19] : memref<1x1xf32, #tpu.memory_space<vmem>>, vector<1x1xf32>
    tpu.vector_store %arg7[%c0_18, %c0_19], %33 {strides = array<i32>} : memref<1x1xf32, #tpu.memory_space<vmem>>, vector<1x1xf32>,
    %c0_20 = arith.constant 0 : index
    %c0_21 = arith.constant 0 : index
    %35 = vector.load %arg8[%c0_20, %c0_21] : memref<1x32xf32, #tpu.memory_space<vmem>>, vector<1x32xf32>
    %36 = vector.broadcast %25 : vector<1x1xf32> to vector<1x32xf32>
    %37 = arith.mulf %36, %35 : vector<1x32xf32>
    %cst_22 = arith.constant dense<0.000000e+00> : vector<1x32xf32>
    %38 = tpu.matmul %28, %6, %cst_22 {dimension_numbers = #tpu.dot_dimension_numbers<[0], [0], [1], [1], [0, 1, 1, 1], [], []>} : vector<16x1xf32>, vector<16x32xf32>, vector<1x32xf32> -> vector<1x32xf32>
    %39 = arith.addf %37, %38 : vector<1x32xf32>
    %c0_23 = arith.constant 0 : index
    %c0_24 = arith.constant 0 : index
    %40 = vector.load %arg8[%c0_23, %c0_24] : memref<1x32xf32, #tpu.memory_space<vmem>>, vector<1x32xf32>
    tpu.vector_store %arg8[%c0_23, %c0_24], %39 {strides = array<i32>} : memref<1x32xf32, #tpu.memory_space<vmem>>, vector<1x32xf32>,
    %c0_25 = arith.constant 0 : index
    %c0_26 = arith.constant 0 : index
    %41 = vector.load %arg6[%c0_25, %c0_26] : memref<1x1xf32, #tpu.memory_space<vmem>>, vector<1x1xf32>
    tpu.vector_store %arg6[%c0_25, %c0_26], %23 {strides = array<i32>} : memref<1x1xf32, #tpu.memory_space<vmem>>, vector<1x1xf32>,
    %c0_i32_27 = arith.constant 0 : i32
    %42 = arith.cmpi eq, %arg1, %c0_i32_27 : i32
    %43 = arith.extui %42 : i1 to i32
    %c0_i32_28 = arith.constant 0 : i32
    %44 = arith.cmpi ne, %43, %c0_i32_28 : i32
    scf.if %44 {
      %c0_29 = arith.constant 0 : index
      %c0_30 = arith.constant 0 : index
      %45 = vector.load %arg7[%c0_29, %c0_30] : memref<1x1xf32, #tpu.memory_space<vmem>>, vector<1x1xf32>
      %46 = tpu.reciprocal %45 : vector<1x1xf32> -> vector<1x1xf32>
      %c0_31 = arith.constant 0 : index
      %c0_32 = arith.constant 0 : index
      %47 = vector.load %arg8[%c0_31, %c0_32] : memref<1x32xf32, #tpu.memory_space<vmem>>, vector<1x32xf32>
      %48 = vector.broadcast %46 : vector<1x1xf32> to vector<1x32xf32>
      %49 = arith.mulf %47, %48 : vector<1x32xf32>
      %c0_33 = arith.constant 0 : index
      %c0_34 = arith.constant 0 : index
      %c0_35 = arith.constant 0 : index
      %50 = vector.load %arg5[%c0_33, %c0_34, %c0_35] : memref<1x1x32xf32, #tpu.memory_space<vmem>>, vector<1x1x32xf32>
      %51 = vector.shape_cast %50 : vector<1x1x32xf32> to vector<1x32xf32>
      %52 = vector.shape_cast %49 : vector<1x32xf32> to vector<1x1x32xf32>
      tpu.vector_store %arg5[%c0_33, %c0_34, %c0_35], %52 {strides = array<i32>} : memref<1x1x32xf32, #tpu.memory_space<vmem>>, vector<1x1x32xf32>,
    } else {
    }
    return
  }
  func.func @transform_0(%arg0: i32, %arg1: i32) -> (i32, i32, i32) {
    %c0_i32 = arith.constant 0 : i32
    %c0_i32_0 = arith.constant 0 : i32
    %c0_i32_1 = arith.constant 0 : i32
    return %arg0, %c0_i32, %c0_i32_0 : i32, i32, i32
  }
  func.func @transform_1(%arg0: i32, %arg1: i32) -> (i32, i32, i32) {
    %c0_i32 = arith.constant 0 : i32
    %c0_i32_0 = arith.constant 0 : i32
    return %arg0, %arg1, %c0_i32 : i32, i32, i32
  }
  func.func @transform_2(%arg0: i32, %arg1: i32) -> (i32, i32) {
    %c0_i32 = arith.constant 0 : i32
    %c0_i32_0 = arith.constant 0 : i32
    %c0_i32_1 = arith.constant 0 : i32
    return %c0_i32, %c0_i32_0 : i32, i32
  }
  func.func @transform_3(%arg0: i32, %arg1: i32) -> (i32, i32, i32) {
    %c0_i32 = arith.constant 0 : i32
    %c0_i32_0 = arith.constant 0 : i32
    %c0_i32_1 = arith.constant 0 : i32
    return %arg0, %c0_i32, %c0_i32_0 : i32, i32, i32
  }
}

</mosaic_0001>

<llo_original>
// kernel: tpu_custom_call.1
$region0: #{tpu_custom_call.1}
  #allocation0 [shape = 'u32[]', space=smem, size = 0x4, offset = 0x4, fixed_abs, tag = 'smem constant byte address 0x4 - core index']
  #allocation1 [shape = 'u32[144,128]{1,0:T(1,128)}', space=vmem, size = 0x12000, scoped, tag = 'internal scratch']
  #allocation2 [shape = 'f32[1,1]{1,0:T(1,128)}', space=vmem, size = 0x200, scoped, tag = 'scratch operand']
  #allocation3 [shape = 'f32[1,1]{1,0:T(1,128)}', space=vmem, size = 0x200, scoped, tag = 'scratch operand']
  #allocation4 [shape = 'f32[1,32]{1,0:T(1,128)}', space=vmem, size = 0x200, scoped, tag = 'scratch operand']
  %s0 = inlined_call_operand.hbm [shape: f32[2,8,32], index: 0, kind: input, shape index: {}]
  %s1 = inlined_call_operand.hbm [shape: f32[2,16,32], index: 1, kind: input, shape index: {}]
  %s2 = inlined_call_operand.hbm [shape: f32[3,32], index: 2, kind: input, shape index: {}]
  %s3 = inlined_call_operand.hbm [shape: f32[2,1,32], index: 3, kind: output, shape index: {}]
  %s4 = sld [smem:[#allocation0]]
  $region65: #{tpu_custom_call.1} parent=0
    _
  %s6 = ssub.s32 1, %s4
  %s7 = scalar_select 0, %s6, %s4
  $region1: #{tpu_custom_call.1} parent=0
    #allocation5 [shape = 'u8[8192]{0}', space=vmem, size = 0x2000, scoped, tag = 'input window, operand 0']
    #allocation6 [shape = 's32[2]{0}', space=sflag, size = 0x8, scoped, tag = 'scoped memory for tpu_custom_call.1']
    #allocation7 [shape = 's32[2]{0}', space=sflag, size = 0x8, scoped, tag = 'scoped memory for tpu_custom_call.1']
    #allocation8 [shape = 'u8[16384]{0}', space=vmem, size = 0x4000, scoped, tag = 'input window, operand 1']
    #allocation9 [shape = 's32[2]{0}', space=sflag, size = 0x8, scoped, tag = 'scoped memory for tpu_custom_call.1']
    #allocation10 [shape = 'u8[2048]{0}', space=vmem, size = 0x800, scoped, tag = 'input window, operand 2, single buffered']
    #allocation11 [shape = 'u8[1024]{0}', space=vmem, size = 0x400, scoped, tag = 'output window, operand 0']
    %8 = vsyncpa [#allocation6], 0
    %s9 = scalar_lea.sflag [#allocation6], 1
    %10 = vsyncpa %s9, 0
    %11 = vsyncpa [#allocation9], 0
    %s12 = scalar_lea.sflag [#allocation9], 1
    %13 = vsyncpa %s12, 0
    %14 = vsyncpa [#allocation7], 0
    %s15 = scalar_lea.sflag [#allocation7], 1
    %16 = vsyncpa %s15, 0
    loop: start=0, step=1, limit=4
    $region2: #{tpu_custom_call.1} parent=1 // loop_pre_header
      _
    $region3: #{tpu_custom_call.1} parent=1 // loop_header
      %s18 = sphi 0, %s22
      %p19 = scmp.ge.s32.totalorder %s18, 4
      %s25 = sphi 0, %s37
      %s26 = sphi 0, %s33
      %s27 = sphi 0, %s25
      %s28 = sphi 0, %s26
      %s29 = sphi 0, %s27
      %s30 = sphi 0, %s28
      %s40 = sphi 0, %s42
      %s43 = sphi 0, %s40
      %s44 = sphi 0, %s43
      %s60 = sphi 0, %s44
      %s68 = sphi 0, %s70
      %s71 = sphi 0, %s68
      %s72 = sphi 0, %s71
      %s88 = sphi 0, %s72
      %s92 = sphi 0, %s92
      %s94 = sphi 0, %s92
      %s95 = sphi 0, %s94
      %s109 = sphi 0, %s95
      %s115 = sphi 0, %s117
      %s118 = sphi 0, %s115
      %s119 = sphi 0, %s118
      %s135 = sphi 0, %s119
    $region4: #{tpu_custom_call.1} parent=1 // loop_header_branch
      %21 = sbr.rel (%p19) target = $region8
    $region5: #{tpu_custom_call.1} parent=1 // loop_body
      %s23 = ssub.s32 %s18, 1
      %s24 = ssub.s32 %s18, 2
      %s31 = sadd.s32 1, %s26
      %p32 = scmp.ge.s32.totalorder %s31, 1
      %s33 = scalar_select %p32, 0, %s31
      %s34 = sadd.s32 1, %s25
      %s35 = scalar_select %p32, %s34, %s25
      %p36 = scmp.ge.s32.totalorder %s35, 2
      %s37 = scalar_select %p36, 0, %s35
      %s38 = ssub.s32 %s25, %s37
      %p39 = scmp.eq.s32.totalorder %s38, 0
      %s41 = sadd.s32 %s40, 1
      %s42 = scalar_select %p39, %s40, %s41
      %p45 = pneg %p39
      %p46 = scmp.eq.s32.totalorder %s18, 1
      %p47 = por %p45, %p46
      %p48 = scmp.ne.s32.totalorder %s40, %s43
      %p49 = scmp.eq.s32.totalorder %s18, 0
      %p50 = por %p48, %p49
      %p51 = scmp.ne.s32.totalorder %s40, %s43
      %p52 = scmp.eq.s32.totalorder %s23, 1
      %p53 = por %p51, %p52
      %p54 = scmp.ne.s32.totalorder %s43, %s44
      %p55 = scmp.eq.s32.totalorder %s23, 0
      %p56 = por %p54, %p55
      %p57 = scmp.ne.s32.totalorder %s43, %s44
      %p58 = scmp.eq.s32.totalorder %s24, 1
      %p59 = por %p57, %p58
      %p61 = scmp.ne.s32.totalorder %s44, %s60
      %p62 = scmp.eq.s32.totalorder %s24, 0
      %p63 = por %p61, %p62
      %s64 = ssub.s32 %s25, %s37
      %s65 = ssub.s32 %s26, %s33
      %s66 = sor.u32 %s64, %s65
      %p67 = scmp.eq.s32.totalorder %s66, 0
      %s69 = sadd.s32 %s68, 1
      %s70 = scalar_select %p67, %s68, %s69
      %p73 = pneg %p67
      %p74 = scmp.eq.s32.totalorder %s18, 1
      %p75 = por %p73, %p74
      %p76 = scmp.ne.s32.totalorder %s68, %s71
      %p77 = scmp.eq.s32.totalorder %s18, 0
      %p78 = por %p76, %p77
      %p79 = scmp.ne.s32.totalorder %s68, %s71
      %p80 = scmp.eq.s32.totalorder %s23, 1
      %p81 = por %p79, %p80
      %p82 = scmp.ne.s32.totalorder %s71, %s72
      %p83 = scmp.eq.s32.totalorder %s23, 0
      %p84 = por %p82, %p83
      %p85 = scmp.ne.s32.totalorder %s71, %s72
      %p86 = scmp.eq.s32.totalorder %s24, 1
      %p87 = por %p85, %p86
      %p89 = scmp.ne.s32.totalorder %s72, %s88
      %p90 = scmp.eq.s32.totalorder %s24, 0
      %p91 = por %p89, %p90
      %s93 = sadd.s32 %s92, 1
      %p96 = scmp.eq.s32.totalorder %s18, 1
      %p97 = scmp.ne.s32.totalorder %s92, %s94
      %p98 = scmp.eq.s32.totalorder %s18, 0
      %p99 = por %p97, %p98
      %p100 = scmp.ne.s32.totalorder %s92, %s94
      %p101 = scmp.eq.s32.totalorder %s23, 1
      %p102 = por %p100, %p101
      %p103 = scmp.ne.s32.totalorder %s94, %s95
      %p104 = scmp.eq.s32.totalorder %s23, 0
      %p105 = por %p103, %p104
      %p106 = scmp.ne.s32.totalorder %s94, %s95
      %p107 = scmp.eq.s32.totalorder %s24, 1
      %p108 = por %p106, %p107
      %p110 = scmp.ne.s32.totalorder %s95, %s109
      %p111 = scmp.eq.s32.totalorder %s24, 0
      %p112 = por %p110, %p111
      %s113 = ssub.s32 %s25, %s37
      %p114 = scmp.eq.s32.totalorder %s113, 0
      %s116 = sadd.s32 %s115, 1
      %s117 = scalar_select %p114, %s115, %s116
      %p120 = pneg %p114
      %p121 = scmp.eq.s32.totalorder %s18, 1
      %p122 = por %p120, %p121
      %p123 = scmp.ne.s32.totalorder %s115, %s118
      %p124 = scmp.eq.s32.totalorder %s18, 0
      %p125 = por %p123, %p124
      %p126 = scmp.ne.s32.totalorder %s115, %s118
      %p127 = scmp.eq.s32.totalorder %s23, 1
      %p128 = por %p126, %p127
      %p129 = scmp.ne.s32.totalorder %s118, %s119
      %p130 = scmp.eq.s32.totalorder %s23, 0
      %p131 = por %p129, %p130
      %p132 = scmp.ne.s32.totalorder %s118, %s119
      %p133 = scmp.eq.s32.totalorder %s24, 1
      %p134 = por %p132, %p133
      %p136 = scmp.ne.s32.totalorder %s119, %s135
      %p137 = scmp.eq.s32.totalorder %s24, 0
      %p138 = por %p136, %p137
      %p139 = scmp.le.s32.totalorder 1, %s18
      %p140 = scmp.lt.s32.totalorder %s18, 3
      %p141 = pnand %p139, %p140
      %p142 = pneg %p141
      // Predicated region
      $region9: #{tpu_custom_call.1} parent=5 // pred_check
        _
      $region10: #{tpu_custom_call.1} parent=5 // pred_check_branch
        %144 = sbr.rel (%p141) target = $region12
      $region11: #{tpu_custom_call.1} parent=5 // pred_region
        %s145 = ssub.s32 %s18, 1
        // Predicated region
        $region13: #{tpu_custom_call.1} parent=11 // pred_check
          %p146 = pneg %p105
        $region14: #{tpu_custom_call.1} parent=11 // pred_check_branch
          %148 = sbr.rel (%p146) target = $region16
        $region15: #{tpu_custom_call.1} parent=11 // pred_region
          %s150 = ssub.s32 64, 64
          %151 = vsyncadd [#allocation9], %s150
          %s153 = sshll.u32 [#allocation10], 4
          %s154 = int_to_ptr.vmem [resolvable:$true] %s153
          %156 = dma.hbm_to_vmem [thread:$0]  %s2, 64, %s154, [#allocation9]
        $region16: #{tpu_custom_call.1} parent=11 // pred_fallthru
          _
      $region12: #{tpu_custom_call.1} parent=5 // pred_fallthru
        _
      %p157 = scmp.lt.s32.totalorder %s18, 2
      // Predicated region
      $region17: #{tpu_custom_call.1} parent=5 // pred_check
        %p158 = pneg %p157
      $region18: #{tpu_custom_call.1} parent=5 // pred_check_branch
        %160 = sbr.rel (%p158) target = $region20
      $region19: #{tpu_custom_call.1} parent=5 // pred_region
        // Predicated region
        $region21: #{tpu_custom_call.1} parent=19 // pred_check
          %p161 = pneg %p50
        $region22: #{tpu_custom_call.1} parent=19 // pred_check_branch
          %163 = sbr.rel (%p161) target = $region24
        $region23: #{tpu_custom_call.1} parent=19 // pred_region
          %s164 = sand.u32 %s40, 1
          %s165 = scalar_lea.sflag [#allocation6], %s164
          %s166 = sand.u32 %s40, 1
          %s167 = smul.addr %s166, 8
          %s168 = scalar_lea.vmem [#allocation5], %s167
          %s170 = ssub.s32 128, 128
          %171 = vsyncadd %s165, %s170
          %s172 = smul.addr %s25, 128
          %s173 = scalar_lea.hbm %s0, %s172
          %s175 = sshll.u32 %s168, 4
          %s176 = int_to_ptr.vmem [resolvable:$true] %s175
          %178 = dma.hbm_to_vmem [thread:$0]  %s173, 128, %s176, %s165
        $region24: #{tpu_custom_call.1} parent=19 // pred_fallthru
          _
        // Predicated region
        $region25: #{tpu_custom_call.1} parent=19 // pred_check
          %p179 = pneg %p78
        $region26: #{tpu_custom_call.1} parent=19 // pred_check_branch
          %181 = sbr.rel (%p179) target = $region28
        $region27: #{tpu_custom_call.1} parent=19 // pred_region
          %s182 = sand.u32 %s18, 1
          %s183 = scalar_lea.sflag [#allocation9], %s182
          %s184 = sand.u32 %s68, 1
          %s185 = smul.addr %s184, 16
          %s186 = scalar_lea.vmem [#allocation8], %s185
          %s187 = smul.u32 2, %s26
          %s189 = ssub.s32 256, 256
          %190 = vsyncadd %s183, %s189
          %s191 = smul.addr %s25, 2
          %s192 = sadd.s32 %s187, %s191
          %s193 = smul.addr %s192, 128
          %s194 = scalar_lea.hbm %s1, %s193
          %s195 = sshll.u32 %s186, 4
          %s196 = int_to_ptr.vmem [resolvable:$true] %s195
          %201 = dma.hbm_to_vmem [thread:$0]  %s194, 256, %s196, %s183, 128, 128, 8
        $region28: #{tpu_custom_call.1} parent=19 // pred_fallthru
          _
      $region20: #{tpu_custom_call.1} parent=5 // pred_fallthru
        _
      %p202 = scmp.le.s32.totalorder 1, %s18
      %p203 = scmp.lt.s32.totalorder %s18, 3
      %p204 = pnand %p202, %p203
      %p205 = pneg %p204
      // Predicated region
      $region29: #{tpu_custom_call.1} parent=5 // pred_check
        _
      $region30: #{tpu_custom_call.1} parent=5 // pred_check_branch
        %207 = sbr.rel (%p204) target = $region32
      $region31: #{tpu_custom_call.1} parent=5 // pred_region
        %s208 = ssub.s32 %s18, 1
        %s209 = sand.u32 %s43, 1
        %s210 = scalar_lea.sflag [#allocation6], %s209
        %s211 = sand.u32 %s43, 1
        %s212 = smul.addr %s211, 8
        %s213 = scalar_lea.vmem [#allocation5], %s212
        // Predicated region
        $region33: #{tpu_custom_call.1} parent=31 // pred_check
          %p214 = pneg %p56
        $region34: #{tpu_custom_call.1} parent=31 // pred_check_branch
          %216 = sbr.rel (%p214) target = $region36
        $region35: #{tpu_custom_call.1} parent=31 // pred_region
          %217 = dma.done %s210, 128
        $region36: #{tpu_custom_call.1} parent=31 // pred_fallthru
          _
        %s218 = sand.u32 %s23, 1
        %s219 = scalar_lea.sflag [#allocation9], %s218
        %s220 = sand.u32 %s71, 1
        %s221 = smul.addr %s220, 16
        %s222 = scalar_lea.vmem [#allocation8], %s221
        // Predicated region
        $region37: #{tpu_custom_call.1} parent=31 // pred_check
          %p223 = pneg %p84
        $region38: #{tpu_custom_call.1} parent=31 // pred_check_branch
          %225 = sbr.rel (%p223) target = $region40
        $region39: #{tpu_custom_call.1} parent=31 // pred_region
          %226 = dma.done %s219, 256
        $region40: #{tpu_custom_call.1} parent=31 // pred_fallthru
          _
        // Predicated region
        $region41: #{tpu_custom_call.1} parent=31 // pred_check
          %p227 = pneg %p105
        $region42: #{tpu_custom_call.1} parent=31 // pred_check_branch
          %229 = sbr.rel (%p227) target = $region44
        $region43: #{tpu_custom_call.1} parent=31 // pred_region
          %230 = dma.done [#allocation9], 64
        $region44: #{tpu_custom_call.1} parent=31 // pred_fallthru
          _
        %s231 = sand.u32 %s43, 1
        %s232 = scalar_lea.sflag [#allocation6], %s231
        %s233 = sand.u32 %s43, 1
        %s234 = smul.addr %s233, 8
        %s235 = scalar_lea.vmem [#allocation5], %s234
        %p236 = pneg %p56
        %p237 = pneg %p53
        %s238 = sand.u32 %s23, 1
        %s239 = scalar_lea.sflag [#allocation9], %s238
        %s240 = sand.u32 %s71, 1
        %s241 = smul.addr %s240, 16
        %s242 = scalar_lea.vmem [#allocation8], %s241
        %p243 = pneg %p84
        %p244 = pneg %p81
        %p245 = pneg %p105
        %p246 = pneg %p102
        %p247 = pneg %p131
        %p248 = pneg %p128
        %s249 = sand.u32 %s118, 1
        %s250 = scalar_lea.sflag [#allocation7], %s249
        %s251 = sand.u32 %s118, 1
        %s252 = scalar_lea.vmem [#allocation11], %s251
        %s253 = smul.u32 2, %s28
        %p254 = scmp.eq.s32.totalorder %s28, 0
        // Predicated region
        $region45: #{tpu_custom_call.1} parent=31 // pred_check
          %p255 = pneg %p254
        $region46: #{tpu_custom_call.1} parent=31 // pred_check_branch
          %257 = sbr.rel (%p255) target = $region48
        $region47: #{tpu_custom_call.1} parent=31 // pred_region
          %vm258 = vcmask 0
          %259 = vst.msk [vmem:[#allocation2] sm:$0x1] %vm258, -inf
          %260 = vst.msk [vmem:[#allocation3] sm:$0x1] %vm258, 0.0
          %vm261 = vcmask 253952
          %262 = vst.msk [vmem:[#allocation4] sm:$0x1] %vm261, 0.0
        $region48: #{tpu_custom_call.1} parent=31 // pred_fallthru
          _
        %v263 = vld [vmem:[%s213] sm:$0xff]
        %v264 = vld [vmem:[%s222] sm:$0xff]
        %v265 = vld [vmem:[%s222 + $0x8] sm:$0xff]
        %v266 = vld [vmem:[#allocation10] sm:$0x1]
        %v267 = vld [vmem:[#allocation10 + $0x1] sm:$0x1]
        %v268 = vld [vmem:[#allocation10 + $0x2] sm:$0x1]
        %v269 = vlaneseq
        %v270 = vshrl.u32 %v269, 7
        %v271 = vsub.s32 0, %v270
        %v272 = vrot.slane %v268, %v271
        %v273 = vmul.f32 %v263, %v272
        %v274 = vlaneseq
        %v275 = vshrl.u32 %v274, 7
        %v276 = vsub.s32 0, %v275
        %v277 = vrot.slane %v267, %v276
        %v278 = vadd.f32 %v273, %v277
        %vm279 = vcmask 261120
        %v281 = vsel %vm279, %v266, 0
        %v284 = vsel %vm279, %v263, 0
        %286 = vmatprep.subr.mxu0 0.0
        %287 = vmatpush1.xpose.msra.mxu0 0.0
        %288 = vmatprep.subr.mxu0 0.0
        %289 = vmatpush1.xpose.msra.mxu0 0.0
        %290 = vmatprep.subr.mxu0 0.0
        %291 = vmatpush1.xpose.msra.mxu0 0.0
        %292 = vmatprep.subr.mxu0 0.0
        %293 = vmatpush1.xpose.msra.mxu0 0.0
        %294 = vmatprep.subr.mxu0 0.0
        %295 = vmatpush1.xpose.msra.mxu0 0.0
        %296 = vmatprep.subr.mxu0 0.0
        %297 = vmatpush1.xpose.msra.mxu0 0.0
        %298 = vmatprep.subr.mxu0 0.0
        %299 = vmatpush1.xpose.msra.mxu0 0.0
        %300 = vmatprep.subr.mxu0 0.0
        %301 = vmatpush1.xpose.msra.mxu0 0.0
        %302 = vmatprep.subr.mxu0 0.0
        %303 = vmatpush1.xpose.msra.mxu0 0.0
        %304 = vmatprep.subr.mxu0 0.0
        %305 = vmatpush1.xpose.msra.mxu0 0.0
        %306 = vmatprep.subr.mxu0 0.0
        %307 = vmatpush1.xpose.msra.mxu0 0.0
        %308 = vmatprep.subr.mxu0 0.0
        %309 = vmatpush1.xpose.msra.mxu0 0.0
        %310 = vmatprep.subr.mxu0 0.0
        %311 = vmatpush1.xpose.msra.mxu0 0.0
        %312 = vmatprep.subr.mxu0 0.0
        %313 = vmatpush1.xpose.msra.mxu0 0.0
        %314 = vmatprep.subr.mxu0 0.0
        %315 = vmatpush1.xpose.msra.mxu0 0.0
        %316 = vmatprep.subr.mxu0 0.0
        %317 = vmatpush1.xpose.msra.mxu0 %v284
        %318 = vmatprep.subr.mxu0 0.0
        %319 = vmatpush2.xpose.msra.mxu0 0.0
        %320 = vmatprep.subr.mxu0 0.0
        %321 = vmatpush2.xpose.msra.mxu0 0.0
        %322 = vmatprep.subr.mxu0 0.0
        %323 = vmatpush2.xpose.msra.mxu0 0.0
        %324 = vmatprep.subr.mxu0 0.0
        %325 = vmatpush2.xpose.msra.mxu0 0.0
        %326 = vmatprep.subr.mxu0 0.0
        %327 = vmatpush2.xpose.msra.mxu0 0.0
        %328 = vmatprep.subr.mxu0 0.0
        %329 = vmatpush2.xpose.msra.mxu0 0.0
        %330 = vmatprep.subr.mxu0 0.0
        %331 = vmatpush2.xpose.msra.mxu0 0.0
        %332 = vmatprep.subr.mxu0 0.0
        %333 = vmatpush2.xpose.msra.mxu0 0.0
        %334 = vmatprep.subr.mxu0 0.0
        %335 = vmatpush2.xpose.msra.mxu0 0.0
        %336 = vmatprep.subr.mxu0 0.0
        %337 = vmatpush2.xpose.msra.mxu0 0.0
        %338 = vmatprep.subr.mxu0 0.0
        %339 = vmatpush2.xpose.msra.mxu0 0.0
        %340 = vmatprep.subr.mxu0 0.0
        %341 = vmatpush2.xpose.msra.mxu0 0.0
        %342 = vmatprep.subr.mxu0 0.0
        %343 = vmatpush2.xpose.msra.mxu0 0.0
        %344 = vmatprep.subr.mxu0 0.0
        %345 = vmatpush2.xpose.msra.mxu0 0.0
        %346 = vmatprep.subr.mxu0 0.0
        %347 = vmatpush2.xpose.msra.mxu0 0.0
        %348 = vmatprep.subr.mxu0 0.0
        %349 = vmatpush2.xpose.msra.mxu0 0.0
        %350 = vmatprep.mubr.f32.mxu0 0.0
        %351 = vmatmul.mubr.f32.gmra.mxu0 %v281
        %v352 = vpop.f32.mrf.mxu0
        %v353 = vadd.f32 0.0, %v352
        %v354 = vpop.f32.mrf.mxu0
        %355 = vdwg.mxu0
        %v356 = vlaneseq
        %v357 = vshrl.u32 %v356, 7
        %v358 = vsub.s32 0, %v357
        %v359 = vrot.slane %v353, %v358
        %v361 = vsel %vm279, %v264, 0
        %v364 = vsel %vm279, %v265, 0
        %v367 = vsel %vm279, %v278, 0
        %369 = vmatprep.subr.mxu0 0.0
        %370 = vmatpush1.xpose.msra.mxu0 0.0
        %371 = vmatprep.subr.mxu0 0.0
        %372 = vmatpush1.xpose.msra.mxu0 0.0
        %373 = vmatprep.subr.mxu0 0.0
        %374 = vmatpush1.xpose.msra.mxu0 0.0
        %375 = vmatprep.subr.mxu0 0.0
        %376 = vmatpush1.xpose.msra.mxu0 0.0
        %377 = vmatprep.subr.mxu0 0.0
        %378 = vmatpush1.xpose.msra.mxu0 0.0
        %379 = vmatprep.subr.mxu0 0.0
        %380 = vmatpush1.xpose.msra.mxu0 0.0
        %381 = vmatprep.subr.mxu0 0.0
        %382 = vmatpush1.xpose.msra.mxu0 0.0
        %383 = vmatprep.subr.mxu0 0.0
        %384 = vmatpush1.xpose.msra.mxu0 0.0
        %385 = vmatprep.subr.mxu0 0.0
        %386 = vmatpush1.xpose.msra.mxu0 0.0
        %387 = vmatprep.subr.mxu0 0.0
        %388 = vmatpush1.xpose.msra.mxu0 0.0
        %389 = vmatprep.subr.mxu0 0.0
        %390 = vmatpush1.xpose.msra.mxu0 0.0
        %391 = vmatprep.subr.mxu0 0.0
        %392 = vmatpush1.xpose.msra.mxu0 0.0
        %393 = vmatprep.subr.mxu0 0.0
        %394 = vmatpush1.xpose.msra.mxu0 0.0
        %395 = vmatprep.subr.mxu0 0.0
        %396 = vmatpush1.xpose.msra.mxu0 0.0
        %397 = vmatprep.subr.mxu0 0.0
        %398 = vmatpush1.xpose.msra.mxu0 0.0
        %399 = vmatprep.subr.mxu0 0.0
        %400 = vmatpush1.xpose.msra.mxu0 %v367
        %401 = vmatprep.subr.mxu0 0.0
        %402 = vmatpush2.xpose.msra.mxu0 0.0
        %403 = vmatprep.subr.mxu0 0.0
        %404 = vmatpush2.xpose.msra.mxu0 0.0
        %405 = vmatprep.subr.mxu0 0.0
        %406 = vmatpush2.xpose.msra.mxu0 0.0
        %407 = vmatprep.subr.mxu0 0.0
        %408 = vmatpush2.xpose.msra.mxu0 0.0
        %409 = vmatprep.subr.mxu0 0.0
        %410 = vmatpush2.xpose.msra.mxu0 0.0
        %411 = vmatprep.subr.mxu0 0.0
        %412 = vmatpush2.xpose.msra.mxu0 0.0
        %413 = vmatprep.subr.mxu0 0.0
        %414 = vmatpush2.xpose.msra.mxu0 0.0
        %415 = vmatprep.subr.mxu0 0.0
        %416 = vmatpush2.xpose.msra.mxu0 0.0
        %417 = vmatprep.subr.mxu0 0.0
        %418 = vmatpush2.xpose.msra.mxu0 0.0
        %419 = vmatprep.subr.mxu0 0.0
        %420 = vmatpush2.xpose.msra.mxu0 0.0
        %421 = vmatprep.subr.mxu0 0.0
        %422 = vmatpush2.xpose.msra.mxu0 0.0
        %423 = vmatprep.subr.mxu0 0.0
        %424 = vmatpush2.xpose.msra.mxu0 0.0
        %425 = vmatprep.subr.mxu0 0.0
        %426 = vmatpush2.xpose.msra.mxu0 0.0
        %427 = vmatprep.subr.mxu0 0.0
        %428 = vmatpush2.xpose.msra.mxu0 0.0
        %429 = vmatprep.subr.mxu0 0.0
        %430 = vmatpush2.xpose.msra.mxu0 0.0
        %431 = vmatprep.subr.mxu0 0.0
        %432 = vmatpush2.xpose.msra.mxu0 0.0
        %433 = vmatprep.mubr.f32.mxu0 0.0
        %434 = vmatmul.mubr.f32.gmra.mxu0 %v361
        %v435 = vpop.f32.mrf.mxu0
        %v436 = vadd.f32 %v359, %v435
        %v437 = vpop.f32.mrf.mxu0
        %438 = vmatprep.mubr.f32.mxu0 0.0
        %439 = vmatmul.mubr.f32.gmra.mxu0 %v364
        %v440 = vpop.f32.mrf.mxu0
        %v441 = vadd.f32 %v359, %v440
        %v442 = vpop.f32.mrf.mxu0
        %443 = vdwg.mxu0
        %vm444 = vcmask 64512
        %v445 = vsel %vm444, %v436, -inf
        %446 = vmax.xlane.f32.xlu0 %v445
        %v447 = vpop.xlane.xlu0 %446
        %v448 = vsel %vm444, %v441, -inf
        %449 = vmax.xlane.f32.xlu0 %v448
        %v450 = vpop.xlane.xlu0 %449
        %v451 = vld [vmem:[#allocation2] sm:$0x1]
        %v452 = vmax.f32 %v447, %v450
        %v453 = vrot.slane %v452, 4
        %v454 = vmax.f32 %v452, %v453
        %v455 = vrot.slane %v454, 2
        %v456 = vmax.f32 %v454, %v455
        %v457 = vrot.slane %v456, 1
        %v458 = vmax.f32 %v456, %v457
        %v459 = vmax.f32 %v451, %v458
        %v460 = vsub.f32 %v451, %v459
        %v461 = vmul.f32 %v460, 1.442695
        %v462 = vpow.pop %v461
        %v464 = vlaneseq
        %v465 = vshrl.u32 %v464, 7
        %v466 = vsub.s32 0, %v465
        %v467 = vrot.slane %v459, %v466
        %v469 = vsub.f32 %v447, %v467
        %v470 = vsub.f32 %v450, %v467
        %v471 = vmul.f32 %v469, 1.442695
        %v472 = vpow.pop %v471
        %v473 = vmul.f32 %v470, 1.442695
        %v474 = vpow.pop %v473
        %v475 = vld [vmem:[#allocation3] sm:$0x1]
        %v476 = vmul.f32 %v462, %v475
        %vm477 = vcmask 7168
        %v478 = vsel %vm477, %v472, 0.0
        %v479 = vsel %vm477, %v474, 0.0
        %v480 = vadd.f32 %v478, %v479
        %v481 = vrot.slane %v480, 4
        %v482 = vadd.f32 %v480, %v481
        %v483 = vrot.slane %v482, 2
        %v484 = vadd.f32 %v482, %v483
        %v485 = vrot.slane %v484, 1
        %v486 = vadd.f32 %v484, %v485
        %v487 = vadd.f32 %v476, %v486
        %vm488 = vcmask 0
        %489 = vst.msk [vmem:[#allocation3] sm:$0x1] %vm488, %v487
        %v490 = vld [vmem:[#allocation4] sm:$0x1]
        %492 = vset.pattern.permute.xlu0 0
        %493 = vperm.xlu0 %492, %v462
        %v494 = vpop.permute.xlu0 %493
        %v496 = vlaneseq
        %v497 = vshrl.u32 %v496, 7
        %v498 = vsub.s32 0, %v497
        %v499 = vrot.slane %v494, %v498
        %v500 = vmul.f32 %v499, %v490
        %501 = vxpose.xlu0.b32.start [1/16] %v472, 128
        %502 = vxpose.xlu0.b32.cont [2/16] %v474, 128
        %503 = vxpose.xlu0.b32.cont [3/16] 0.0, 128
        %504 = vxpose.xlu0.b32.cont [4/16] 0.0, 128
        %505 = vxpose.xlu0.b32.cont [5/16] 0.0, 128
        %506 = vxpose.xlu0.b32.cont [6/16] 0.0, 128
        %507 = vxpose.xlu0.b32.cont [7/16] 0.0, 128
        %508 = vxpose.xlu0.b32.cont [8/16] 0.0, 128
        %509 = vxpose.xlu0.b32.cont [9/16] 0.0, 128
        %510 = vxpose.xlu0.b32.cont [10/16] 0.0, 128
        %511 = vxpose.xlu0.b32.cont [11/16] 0.0, 128
        %512 = vxpose.xlu0.b32.cont [12/16] 0.0, 128
        %513 = vxpose.xlu0.b32.cont [13/16] 0.0, 128
        %514 = vxpose.xlu0.b32.cont [14/16] 0.0, 128
        %515 = vxpose.xlu0.b32.cont [15/16] 0.0, 128
        %516 = vxpose.xlu0.b32.end [16/16] 0.0, 128
        %v517 = vpop.trf.xlu0
        %v518 = vpop.trf.xlu0
        %v519 = vpop.trf.xlu0
        %v520 = vpop.trf.xlu0
        %v521 = vpop.trf.xlu0
        %v522 = vpop.trf.xlu0
        %v523 = vpop.trf.xlu0
        %v524 = vpop.trf.xlu0
        %v525 = vpop.trf.xlu0
        %v526 = vpop.trf.xlu0
        %v527 = vpop.trf.xlu0
        %v528 = vpop.trf.xlu0
        %v529 = vpop.trf.xlu0
        %v530 = vpop.trf.xlu0
        %v531 = vpop.trf.xlu0
        %v532 = vpop.trf.xlu0
        %vm533 = vcmask 130048
        %v535 = vsel %vm533, %v517, 0
        %537 = vmatprep.subr.mxu0 0.0
        %538 = vmatpush1.msra.mxu0 0.0
        %539 = vmatprep.subr.mxu0 0.0
        %540 = vmatpush1.msra.mxu0 0.0
        %541 = vmatprep.subr.mxu0 0.0
        %542 = vmatpush1.msra.mxu0 0.0
        %543 = vmatprep.subr.mxu0 0.0
        %544 = vmatpush1.msra.mxu0 0.0
        %545 = vmatprep.subr.mxu0 0.0
        %546 = vmatpush1.msra.mxu0 0.0
        %547 = vmatprep.subr.mxu0 0.0
        %548 = vmatpush1.msra.mxu0 0.0
        %549 = vmatprep.subr.mxu0 0.0
        %550 = vmatpush1.msra.mxu0 0.0
        %551 = vmatprep.subr.mxu0 0.0
        %552 = vmatpush1.msra.mxu0 0.0
        %553 = vmatprep.subr.mxu0 0.0
        %554 = vmatpush1.msra.mxu0 0.0
        %555 = vmatprep.subr.mxu0 0.0
        %556 = vmatpush1.msra.mxu0 0.0
        %557 = vmatprep.subr.mxu0 0.0
        %558 = vmatpush1.msra.mxu0 0.0
        %559 = vmatprep.subr.mxu0 0.0
        %560 = vmatpush1.msra.mxu0 0.0
        %561 = vmatprep.subr.mxu0 0.0
        %562 = vmatpush1.msra.mxu0 0.0
        %563 = vmatprep.subr.mxu0 0.0
        %564 = vmatpush1.msra.mxu0 0.0
        %565 = vmatprep.subr.mxu0 0.0
        %566 = vmatpush1.msra.mxu0 %v265
        %567 = vmatprep.subr.mxu0 0.0
        %568 = vmatpush1.msra.mxu0 %v264
        %569 = vmatprep.subr.mxu0 0.0
        %570 = vmatpush2.msra.mxu0 0.0
        %571 = vmatprep.subr.mxu0 0.0
        %572 = vmatpush2.msra.mxu0 0.0
        %573 = vmatprep.subr.mxu0 0.0
        %574 = vmatpush2.msra.mxu0 0.0
        %575 = vmatprep.subr.mxu0 0.0
        %576 = vmatpush2.msra.mxu0 0.0
        %577 = vmatprep.subr.mxu0 0.0
        %578 = vmatpush2.msra.mxu0 0.0
        %579 = vmatprep.subr.mxu0 0.0
        %580 = vmatpush2.msra.mxu0 0.0
        %581 = vmatprep.subr.mxu0 0.0
        %582 = vmatpush2.msra.mxu0 0.0
        %583 = vmatprep.subr.mxu0 0.0
        %584 = vmatpush2.msra.mxu0 0.0
        %585 = vmatprep.subr.mxu0 0.0
        %586 = vmatpush2.msra.mxu0 0.0
        %587 = vmatprep.subr.mxu0 0.0
        %588 = vmatpush2.msra.mxu0 0.0
        %589 = vmatprep.subr.mxu0 0.0
        %590 = vmatpush2.msra.mxu0 0.0
        %591 = vmatprep.subr.mxu0 0.0
        %592 = vmatpush2.msra.mxu0 0.0
        %593 = vmatprep.subr.mxu0 0.0
        %594 = vmatpush2.msra.mxu0 0.0
        %595 = vmatprep.subr.mxu0 0.0
        %596 = vmatpush2.msra.mxu0 0.0
        %597 = vmatprep.subr.mxu0 0.0
        %598 = vmatpush2.msra.mxu0 0.0
        %599 = vmatprep.subr.mxu0 0.0
        %600 = vmatpush2.msra.mxu0 0.0
        %601 = vmatprep.mubr.f32.mxu0 0.0
        %602 = vmatmul.mubr.f32.gmra.mxu0 %v535
        %v603 = vpop.f32.mrf.mxu0
        %v604 = vadd.f32 0.0, %v603
        %v605 = vpop.f32.mrf.mxu0
        %606 = vdwg.mxu0
        %v607 = vadd.f32 %v500, %v604
        %vm608 = vcmask 253952
        %609 = vst.msk [vmem:[#allocation4] sm:$0x1] %vm608, %v607
        %610 = vst.msk [vmem:[#allocation2] sm:$0x1] %vm488, %v459
        // Predicated region
        $region49: #{tpu_custom_call.1} parent=31 // pred_check
          %p611 = pneg %p254
        $region50: #{tpu_custom_call.1} parent=31 // pred_check_branch
          %613 = sbr.rel (%p611) target = $region52
        $region51: #{tpu_custom_call.1} parent=31 // pred_region
          %v614 = vld [vmem:[#allocation3] sm:$0x1]
          %v615 = vrcp.pop %v614
          %v616 = vld [vmem:[#allocation4] sm:$0x1]
          %618 = vset.pattern.permute.xlu0 0
          %619 = vperm.xlu0 %618, %v615
          %v620 = vpop.permute.xlu0 %619
          %v622 = vlaneseq
          %v623 = vshrl.u32 %v622, 7
          %v624 = vsub.s32 0, %v623
          %v625 = vrot.slane %v620, %v624
          %v626 = vmul.f32 %v616, %v625
          %627 = vst.msk [vmem:[%s252] sm:$0x1] %vm608, %v626
        $region52: #{tpu_custom_call.1} parent=31 // pred_fallthru
          _
        %s628 = sand.u32 %s118, 1
        %s629 = scalar_lea.sflag [#allocation7], %s628
        %s630 = sand.u32 %s118, 1
        %s631 = scalar_lea.vmem [#allocation11], %s630
        // Predicated region
        $region53: #{tpu_custom_call.1} parent=31 // pred_check
          %p632 = pneg %p128
        $region54: #{tpu_custom_call.1} parent=31 // pred_check_branch
          %634 = sbr.rel (%p632) target = $region56
        $region55: #{tpu_custom_call.1} parent=31 // pred_region
          %s636 = ssub.s32 16, 16
          %637 = vsyncadd %s629, %s636
          %s638 = smul.addr %s27, 16
          %s639 = scalar_lea.hbm %s3, %s638
          %s641 = sshll.u32 %s631, 4
          %s642 = int_to_ptr.vmem [resolvable:$true] %s641
          %644 = dma.vmem_to_hbm [thread:$0]  %s642, 16, %s639, %s629
        $region56: #{tpu_custom_call.1} parent=31 // pred_fallthru
          _
      $region32: #{tpu_custom_call.1} parent=5 // pred_fallthru
        _
      %p645 = scmp.le.s32.totalorder 2, %s18
      // Predicated region
      $region57: #{tpu_custom_call.1} parent=5 // pred_check
        %p646 = pneg %p645
      $region58: #{tpu_custom_call.1} parent=5 // pred_check_branch
        %648 = sbr.rel (%p646) target = $region60
      $region59: #{tpu_custom_call.1} parent=5 // pred_region
        %s649 = ssub.s32 %s18, 2
        // Predicated region
        $region61: #{tpu_custom_call.1} parent=59 // pred_check
          %p650 = pneg %p134
        $region62: #{tpu_custom_call.1} parent=59 // pred_check_branch
          %652 = sbr.rel (%p650) target = $region64
        $region63: #{tpu_custom_call.1} parent=59 // pred_region
          %s653 = sand.u32 %s119, 1
          %s654 = scalar_lea.sflag [#allocation7], %s653
          %s655 = sand.u32 %s119, 1
          %s656 = scalar_lea.vmem [#allocation11], %s655
          %657 = dma.done %s654, 16
        $region64: #{tpu_custom_call.1} parent=59 // pred_fallthru
          _
      $region60: #{tpu_custom_call.1} parent=5 // pred_fallthru
        _
    $region6: #{tpu_custom_call.1} parent=1 // loop_footer
      %s22 = sadd.s32 1, %s18
    $region7: #{tpu_custom_call.1} parent=1 // loop_footer_branch
      %17 = sbr.rel target = $region3
    $region8: #{tpu_custom_call.1} parent=1 // loop_exit
      _
    %658 = vsyncpa [#allocation6], 1
    %s659 = scalar_lea.sflag [#allocation6], 1
    %660 = vsyncpa %s659, 1
    %661 = vsyncpa [#allocation9], 1
    %s662 = scalar_lea.sflag [#allocation9], 1
    %663 = vsyncpa %s662, 1
    %664 = vsyncpa [#allocation7], 1
    %s665 = scalar_lea.sflag [#allocation7], 1
    %666 = vsyncpa %s665, 1

</llo_original>
